<compile_context>
chip_gen: v7x
topology: tpu7x:2x2x1
jax: 0.10.0
libtpu: 0.0.40
codegen_flags: <defaults>
</compile_context>

<pallas_src>
import jax
import jax.numpy as jnp
from jax.experimental import pallas as pl
from jax.experimental.pallas import tpu as pltpu


def _simple_cell_kernel(x_ref, h_ref, w_ref, b_ref, out_ref):
    # x_ref, h_ref : (tm, D)  bf16 row tiles of the two inputs
    # w_ref        : (2D, D)  bf16 stacked weight [Wx.T ; Wh.T]  (VMEM resident)
    # b_ref        : (1, D)   f32 fused bias (bx + bh)           (VMEM resident)
    # out_ref      : (tm, D)  activation-dtype output tile
    #
    # Concatenate along lanes (128-aligned) so a single K=2D dot fills the
    # 256-deep MXU on v6e/v7x instead of two half-depth K=D dots.
    xh = jnp.concatenate([x_ref[...], h_ref[...]], axis=-1)          # (tm, 2D)
    acc = jnp.dot(xh, w_ref[...], preferred_element_type=jnp.float32)  # f32 acc
    acc = acc + b_ref[...]
    out_ref[...] = jax.nn.sigmoid(acc).astype(out_ref.dtype)


def prepare_simple_cell_params(Wx, bx, Wh, bh, param_dtype=jnp.bfloat16):
    """One-time parameter prep (hoisted out of the per-step forward).

    Wx, Wh: (D, D) in torch nn.Linear layout (y = x @ W.T + b); bx, bh: (D,).
    Returns the stacked, transposed weight (2D, D) in bf16 and the fused
    bias (1, D) kept in f32 (added after f32 accumulation).
    """
    W_stacked = jnp.concatenate(
        [jnp.transpose(Wx), jnp.transpose(Wh)], axis=0).astype(param_dtype)
    bias = (bx.astype(jnp.float32) + bh.astype(jnp.float32))[None, :]
    return W_stacked, bias


def _pick_tm(B, max_tm=2048):
    """Row-tile size: as large as useful, but >= 2 grid steps when B allows
    so v7x's two TensorCores both get work; multiple of 16 (bf16 sublane pack)."""
    def rup(v, m):
        return -(-v // m) * m
    tm = rup(-(-B // 2), 16) if B > 16 else rup(B, 16)
    return min(max_tm, tm)


def simple_cell_forward(x, h, W_stacked, bias, *, max_tm=2048):
    """SimpleCell.forward: sigmoid(x @ Wx.T + bx + h @ Wh.T + bh).

    x, h: (B, D) activations (bf16 recommended — fed to the kernel as-is).
    W_stacked, bias: from prepare_simple_cell_params().
    Output dtype matches the activation dtype.
    """
    B, D = x.shape
    tm = _pick_tm(B, max_tm)
    n_tiles = pl.cdiv(B, tm)      # ragged last tile handled by masked writeback

    return pl.pallas_call(
        _simple_cell_kernel,
        out_shape=jax.ShapeDtypeStruct((B, D), x.dtype),
        grid_spec=pltpu.PrefetchScalarGridSpec(
            num_scalar_prefetch=0,
            grid=(n_tiles,),
            in_specs=[
                pl.BlockSpec((tm, D), lambda i: (i, 0)),       # x row tile
                pl.BlockSpec((tm, D), lambda i: (i, 0)),       # h row tile
                pl.BlockSpec((2 * D, D), lambda i: (0, 0)),    # stacked weight (resident)
                pl.BlockSpec((1, D), lambda i: (0, 0)),        # fused bias (resident)
            ],
            out_specs=pl.BlockSpec((tm, D), lambda i: (i, 0)),
        ),
        compiler_params=pltpu.CompilerParams(
            dimension_semantics=("parallel",)),
    )(x, h, W_stacked, bias)


def _reference(x, h, Wx, bx, Wh, bh):
    """Pure-JAX f32 reference of SimpleCell.forward (for validation)."""
    return jax.nn.sigmoid(x @ Wx.T + bx + h @ Wh.T + bh)


if __name__ == "__main__":
    key = jax.random.PRNGKey(0)
    # Ragged batch (B not a multiple of the row tile) exercises the
    # no-pad / masked-partial-block path; D = 128 keeps blocks lane-dense.
    B, D = 200, 128
    kx, kh, kwx, kwh, kbx, kbh = jax.random.split(key, 6)

    x32 = jax.random.normal(kx, (B, D), jnp.float32)
    h32 = jax.random.normal(kh, (B, D), jnp.float32)
    Wx = 0.1 * jax.random.normal(kwx, (D, D), jnp.float32)
    Wh = 0.1 * jax.random.normal(kwh, (D, D), jnp.float32)
    bx = 0.1 * jax.random.normal(kbx, (D,), jnp.float32)
    bh = 0.1 * jax.random.normal(kbh, (D,), jnp.float32)

    # Parameters prepared once (transpose + stack + bias fusion hoisted out
    # of the per-call path).
    W_stacked, bias = prepare_simple_cell_params(Wx, bx, Wh, bh)

    # Activations are fed in bf16 (mem-bound kernel: halves x/h/out traffic).
    x = x32.astype(jnp.bfloat16)
    h = h32.astype(jnp.bfloat16)

    out = simple_cell_forward(x, h, W_stacked, bias)
    out = jax.block_until_ready(out)

    ref = _reference(x32, h32, Wx, bx, Wh, bh)
    assert out.shape == (B, D)
    assert out.dtype == jnp.bfloat16
    max_err = float(jnp.max(jnp.abs(out.astype(jnp.float32) - ref)))
    # bf16 operands + bf16 output: tolerance relaxed accordingly (f32 accumulation
    # and f32 sigmoid keep the error well below this bound).
    assert max_err < 3e-2, f"max abs error {max_err}"

    print("KERNEL_OK")
</pallas_src>

<mosaic_0001>
module attributes {stable_mosaic.version = 11 : i64} {
  func.func @_simple_cell_kernel(%arg0: i32, %arg1: memref<112x128xbf16, #tpu.memory_space<vmem>>, %arg2: memref<112x128xbf16, #tpu.memory_space<vmem>>, %arg3: memref<256x128xbf16, #tpu.memory_space<vmem>>, %arg4: memref<1x128xf32, #tpu.memory_space<vmem>>, %arg5: memref<112x128xbf16, #tpu.memory_space<vmem>>) attributes {dimension_semantics = [#tpu.dimension_semantics<parallel>], iteration_bounds = array<i64: 2>, scalar_prefetch = 0 : i64, scratch_operands = 0 : i64, tpu.core_type = #tpu.core_type<tc>, window_params = [{transform_indices = @transform_0, window_bounds = array<i64: 112, 128>}, {transform_indices = @transform_1, window_bounds = array<i64: 112, 128>}, {pipeline_mode = #tpu.pipeline_mode<synchronous>, transform_indices = @transform_2, window_bounds = array<i64: 256, 128>}, {pipeline_mode = #tpu.pipeline_mode<synchronous>, transform_indices = @transform_3, window_bounds = array<i64: 1, 128>}, {transform_indices = @transform_4, window_bounds = array<i64: 112, 128>}]} {
    %c0 = arith.constant 0 : index
    %c0_0 = arith.constant 0 : index
    %0 = vector.load %arg1[%c0, %c0_0] : memref<112x128xbf16, #tpu.memory_space<vmem>>, vector<112x128xbf16>
    %c0_1 = arith.constant 0 : index
    %c0_2 = arith.constant 0 : index
    %1 = vector.load %arg2[%c0_1, %c0_2] : memref<112x128xbf16, #tpu.memory_space<vmem>>, vector<112x128xbf16>
    %2 = tpu.concatenate %0, %1 in 1 : vector<112x128xbf16>, vector<112x128xbf16> -> vector<112x256xbf16>
    %c0_3 = arith.constant 0 : index
    %c0_4 = arith.constant 0 : index
    %3 = vector.load %arg3[%c0_3, %c0_4] : memref<256x128xbf16, #tpu.memory_space<vmem>>, vector<256x128xbf16>
    %cst = arith.constant dense<0.000000e+00> : vector<112x128xf32>
    %4 = tpu.matmul %2, %3, %cst {dimension_numbers = #tpu.dot_dimension_numbers<[1], [0], [0], [1], [0, 0, 1, 1], [], []>} : vector<112x256xbf16>, vector<256x128xbf16>, vector<112x128xf32> -> vector<112x128xf32>
    %c0_5 = arith.constant 0 : index
    %c0_6 = arith.constant 0 : index
    %5 = vector.load %arg4[%c0_5, %c0_6] : memref<1x128xf32, #tpu.memory_space<vmem>>, vector<1x128xf32>
    %6 = vector.broadcast %5 : vector<1x128xf32> to vector<112x128xf32>
    %7 = arith.addf %4, %6 : vector<112x128xf32>
    %8 = arith.negf %7 : vector<112x128xf32>
    %9 = math.exp %8 : vector<112x128xf32>
    %cst_7 = arith.constant 1.000000e+00 : f32
    %10 = vector.broadcast %cst_7 : f32 to vector<112x128xf32>
    %11 = arith.addf %10, %9 : vector<112x128xf32>
    %12 = arith.divf %10, %11 : vector<112x128xf32>
    %13 = arith.truncf %12 : vector<112x128xf32> to vector<112x128xbf16>
    %c0_8 = arith.constant 0 : index
    %c0_9 = arith.constant 0 : index
    %14 = vector.load %arg5[%c0_8, %c0_9] : memref<112x128xbf16, #tpu.memory_space<vmem>>, vector<112x128xbf16>
    tpu.vector_store %arg5[%c0_8, %c0_9], %13 {strides = array<i32>} : memref<112x128xbf16, #tpu.memory_space<vmem>>, vector<112x128xbf16>,
    return
  }
  func.func @transform_0(%arg0: i32) -> (i32, i32) {
    %c0_i32 = arith.constant 0 : i32
    %c0_i32_0 = arith.constant 0 : i32
    return %arg0, %c0_i32 : i32, i32
  }
  func.func @transform_1(%arg0: i32) -> (i32, i32) {
    %c0_i32 = arith.constant 0 : i32
    %c0_i32_0 = arith.constant 0 : i32
    return %arg0, %c0_i32 : i32, i32
  }
  func.func @transform_2(%arg0: i32) -> (i32, i32) {
    %c0_i32 = arith.constant 0 : i32
    %c0_i32_0 = arith.constant 0 : i32
    %c0_i32_1 = arith.constant 0 : i32
    return %c0_i32, %c0_i32_0 : i32, i32
  }
  func.func @transform_3(%arg0: i32) -> (i32, i32) {
    %c0_i32 = arith.constant 0 : i32
    %c0_i32_0 = arith.constant 0 : i32
    %c0_i32_1 = arith.constant 0 : i32
    return %c0_i32, %c0_i32_0 : i32, i32
  }
  func.func @transform_4(%arg0: i32) -> (i32, i32) {
    %c0_i32 = arith.constant 0 : i32
    %c0_i32_0 = arith.constant 0 : i32
    return %arg0, %c0_i32 : i32, i32
  }
}

</mosaic_0001>

<llo_original>
// kernel: tpu_custom_call.1
$region0: #{tpu_custom_call.1}
  #allocation0 [shape = 'u32[]', space=smem, size = 0x4, offset = 0x4, fixed_abs, tag = 'smem constant byte address 0x4 - core index']
  #allocation1 [shape = 'u32[144,128]{1,0:T(1,128)}', space=vmem, size = 0x12000, scoped, tag = 'internal scratch']
  %s0 = inlined_call_operand.hbm [shape: bf16[200,128], index: 0, kind: input, shape index: {}]
  %s1 = inlined_call_operand.hbm [shape: bf16[200,128], index: 1, kind: input, shape index: {}]
  %s2 = inlined_call_operand.hbm [shape: bf16[256,128], index: 2, kind: input, shape index: {}]
  %s3 = inlined_call_operand.vmem [shape: f32[1,128], index: 3, kind: input, shape index: {}]
  %s4 = inlined_call_operand.hbm [shape: bf16[200,128], index: 4, kind: output, shape index: {}]
  %s5 = sld [smem:[#allocation0]]
  $region61: #{tpu_custom_call.1} parent=0
    _
  %s7 = ssub.s32 1, %s5
  %s8 = scalar_select 0, %s7, %s5
  $region1: #{tpu_custom_call.1} parent=0
    #allocation2 [shape = 'u8[57344]{0}', space=vmem, size = 0xe000, scoped, tag = 'input window, operand 0']
    #allocation3 [shape = 's32[2]{0}', space=sflag, size = 0x8, scoped, tag = 'scoped memory for tpu_custom_call.1']
    #allocation4 [shape = 's32[2]{0}', space=sflag, size = 0x8, scoped, tag = 'scoped memory for tpu_custom_call.1']
    #allocation5 [shape = 'u8[57344]{0}', space=vmem, size = 0xe000, scoped, tag = 'input window, operand 1']
    #allocation6 [shape = 's32[2]{0}', space=sflag, size = 0x8, scoped, tag = 'scoped memory for tpu_custom_call.1']
    #allocation7 [shape = 'u8[65536]{0}', space=vmem, size = 0x10000, scoped, tag = 'input window, operand 2, single buffered']
    #allocation8 [shape = 'u8[57344]{0}', space=vmem, size = 0xe000, scoped, tag = 'output window, operand 0']
    %9 = vsyncpa [#allocation3], 0
    %s10 = scalar_lea.sflag [#allocation3], 1
    %11 = vsyncpa %s10, 0
    %12 = vsyncpa [#allocation6], 0
    %s13 = scalar_lea.sflag [#allocation6], 1
    %14 = vsyncpa %s13, 0
    %15 = vsyncpa [#allocation4], 0
    %s16 = scalar_lea.sflag [#allocation4], 1
    %17 = vsyncpa %s16, 0
    loop: start=0, step=1, limit=4
    $region2: #{tpu_custom_call.1} parent=1 // loop_pre_header
      _
    $region3: #{tpu_custom_call.1} parent=1 // loop_header
      %s19 = sphi 0, %s23
      %p20 = scmp.ge.s32.totalorder %s19, 4
      %s29 = sphi 0, %s31
      %s32 = sphi 0, %s29
      %s33 = sphi 0, %s32
      %s49 = sphi 0, %s33
      %s55 = sphi 0, %s57
      %s58 = sphi 0, %s55
      %s59 = sphi 0, %s58
      %s75 = sphi 0, %s59
      %s79 = sphi 0, %s79
      %s81 = sphi 0, %s79
      %s82 = sphi 0, %s81
      %s96 = sphi 0, %s82
      %s100 = sphi 0, %s100
      %s102 = sphi 0, %s100
      %s103 = sphi 0, %s102
      %s117 = sphi 0, %s103
      %s123 = sphi 0, %s125
      %s126 = sphi 0, %s123
      %s127 = sphi 0, %s126
      %s143 = sphi 0, %s127
    $region4: #{tpu_custom_call.1} parent=1 // loop_header_branch
      %22 = sbr.rel (%p20) target = $region8
    $region5: #{tpu_custom_call.1} parent=1 // loop_body
      %s24 = ssub.s32 %s19, 1
      %s25 = ssub.s32 %s19, 2
      %s26 = sadd.s32 %s19, 1
      %s27 = ssub.s32 %s19, %s26
      %p28 = scmp.eq.s32.totalorder %s27, 0
      %s30 = sadd.s32 %s29, 1
      %s31 = scalar_select %p28, %s29, %s30
      %p34 = pneg %p28
      %p35 = scmp.eq.s32.totalorder %s19, 1
      %p36 = por %p34, %p35
      %p37 = scmp.ne.s32.totalorder %s29, %s32
      %p38 = scmp.eq.s32.totalorder %s19, 0
      %p39 = por %p37, %p38
      %p40 = scmp.ne.s32.totalorder %s29, %s32
      %p41 = scmp.eq.s32.totalorder %s24, 1
      %p42 = por %p40, %p41
      %p43 = scmp.ne.s32.totalorder %s32, %s33
      %p44 = scmp.eq.s32.totalorder %s24, 0
      %p45 = por %p43, %p44
      %p46 = scmp.ne.s32.totalorder %s32, %s33
      %p47 = scmp.eq.s32.totalorder %s25, 1
      %p48 = por %p46, %p47
      %p50 = scmp.ne.s32.totalorder %s33, %s49
      %p51 = scmp.eq.s32.totalorder %s25, 0
      %p52 = por %p50, %p51
      %s53 = ssub.s32 %s19, %s26
      %p54 = scmp.eq.s32.totalorder %s53, 0
      %s56 = sadd.s32 %s55, 1
      %s57 = scalar_select %p54, %s55, %s56
      %p60 = pneg %p54
      %p61 = scmp.eq.s32.totalorder %s19, 1
      %p62 = por %p60, %p61
      %p63 = scmp.ne.s32.totalorder %s55, %s58
      %p64 = scmp.eq.s32.totalorder %s19, 0
      %p65 = por %p63, %p64
      %p66 = scmp.ne.s32.totalorder %s55, %s58
      %p67 = scmp.eq.s32.totalorder %s24, 1
      %p68 = por %p66, %p67
      %p69 = scmp.ne.s32.totalorder %s58, %s59
      %p70 = scmp.eq.s32.totalorder %s24, 0
      %p71 = por %p69, %p70
      %p72 = scmp.ne.s32.totalorder %s58, %s59
      %p73 = scmp.eq.s32.totalorder %s25, 1
      %p74 = por %p72, %p73
      %p76 = scmp.ne.s32.totalorder %s59, %s75
      %p77 = scmp.eq.s32.totalorder %s25, 0
      %p78 = por %p76, %p77
      %s80 = sadd.s32 %s79, 1
      %p83 = scmp.eq.s32.totalorder %s19, 1
      %p84 = scmp.ne.s32.totalorder %s79, %s81
      %p85 = scmp.eq.s32.totalorder %s19, 0
      %p86 = por %p84, %p85
      %p87 = scmp.ne.s32.totalorder %s79, %s81
      %p88 = scmp.eq.s32.totalorder %s24, 1
      %p89 = por %p87, %p88
      %p90 = scmp.ne.s32.totalorder %s81, %s82
      %p91 = scmp.eq.s32.totalorder %s24, 0
      %p92 = por %p90, %p91
      %p93 = scmp.ne.s32.totalorder %s81, %s82
      %p94 = scmp.eq.s32.totalorder %s25, 1
      %p95 = por %p93, %p94
      %p97 = scmp.ne.s32.totalorder %s82, %s96
      %p98 = scmp.eq.s32.totalorder %s25, 0
      %p99 = por %p97, %p98
      %s101 = sadd.s32 %s100, 1
      %p104 = scmp.eq.s32.totalorder %s19, 1
      %p105 = scmp.ne.s32.totalorder %s100, %s102
      %p106 = scmp.eq.s32.totalorder %s19, 0
      %p107 = por %p105, %p106
      %p108 = scmp.ne.s32.totalorder %s100, %s102
      %p109 = scmp.eq.s32.totalorder %s24, 1
      %p110 = por %p108, %p109
      %p111 = scmp.ne.s32.totalorder %s102, %s103
      %p112 = scmp.eq.s32.totalorder %s24, 0
      %p113 = por %p111, %p112
      %p114 = scmp.ne.s32.totalorder %s102, %s103
      %p115 = scmp.eq.s32.totalorder %s25, 1
      %p116 = por %p114, %p115
      %p118 = scmp.ne.s32.totalorder %s103, %s117
      %p119 = scmp.eq.s32.totalorder %s25, 0
      %p120 = por %p118, %p119
      %s121 = ssub.s32 %s19, %s26
      %p122 = scmp.eq.s32.totalorder %s121, 0
      %s124 = sadd.s32 %s123, 1
      %s125 = scalar_select %p122, %s123, %s124
      %p128 = pneg %p122
      %p129 = scmp.eq.s32.totalorder %s19, 1
      %p130 = por %p128, %p129
      %p131 = scmp.ne.s32.totalorder %s123, %s126
      %p132 = scmp.eq.s32.totalorder %s19, 0
      %p133 = por %p131, %p132
      %p134 = scmp.ne.s32.totalorder %s123, %s126
      %p135 = scmp.eq.s32.totalorder %s24, 1
      %p136 = por %p134, %p135
      %p137 = scmp.ne.s32.totalorder %s126, %s127
      %p138 = scmp.eq.s32.totalorder %s24, 0
      %p139 = por %p137, %p138
      %p140 = scmp.ne.s32.totalorder %s126, %s127
      %p141 = scmp.eq.s32.totalorder %s25, 1
      %p142 = por %p140, %p141
      %p144 = scmp.ne.s32.totalorder %s127, %s143
      %p145 = scmp.eq.s32.totalorder %s25, 0
      %p146 = por %p144, %p145
      %p147 = scmp.le.s32.totalorder 1, %s19
      %p148 = scmp.lt.s32.totalorder %s19, 3
      %p149 = pnand %p147, %p148
      %p150 = pneg %p149
      // Predicated region
      $region9: #{tpu_custom_call.1} parent=5 // pred_check
        _
      $region10: #{tpu_custom_call.1} parent=5 // pred_check_branch
        %152 = sbr.rel (%p149) target = $region12
      $region11: #{tpu_custom_call.1} parent=5 // pred_region
        %s153 = ssub.s32 %s19, 1
        // Predicated region
        $region13: #{tpu_custom_call.1} parent=11 // pred_check
          %p154 = pneg %p92
        $region14: #{tpu_custom_call.1} parent=11 // pred_check_branch
          %156 = sbr.rel (%p154) target = $region16
        $region15: #{tpu_custom_call.1} parent=11 // pred_region
          %s158 = ssub.s32 2048, 2048
          %159 = vsyncadd [#allocation6], %s158
          %s160 = sshll.u32 [#allocation7], 4
          %s161 = int_to_ptr.vmem [resolvable:$true] %s160
          %166 = dma.hbm_to_vmem [thread:$0]  %s2, 2048, %s161, [#allocation6], 64, 64, 4
        $region16: #{tpu_custom_call.1} parent=11 // pred_fallthru
          _
        // Predicated region
        $region17: #{tpu_custom_call.1} parent=11 // pred_check
          %p167 = pneg %p113
        $region18: #{tpu_custom_call.1} parent=11 // pred_check_branch
          %169 = sbr.rel (%p167) target = $region20
        $region19: #{tpu_custom_call.1} parent=11 // pred_region
          _
        $region20: #{tpu_custom_call.1} parent=11 // pred_fallthru
          _
      $region12: #{tpu_custom_call.1} parent=5 // pred_fallthru
        _
      %p170 = scmp.lt.s32.totalorder %s19, 2
      // Predicated region
      $region21: #{tpu_custom_call.1} parent=5 // pred_check
        %p171 = pneg %p170
      $region22: #{tpu_custom_call.1} parent=5 // pred_check_branch
        %173 = sbr.rel (%p171) target = $region24
      $region23: #{tpu_custom_call.1} parent=5 // pred_region
        // Predicated region
        $region25: #{tpu_custom_call.1} parent=23 // pred_check
          %p174 = pneg %p39
        $region26: #{tpu_custom_call.1} parent=23 // pred_check_branch
          %176 = sbr.rel (%p174) target = $region28
        $region27: #{tpu_custom_call.1} parent=23 // pred_region
          %s177 = sand.u32 %s29, 1
          %s178 = scalar_lea.sflag [#allocation3], %s177
          %s179 = sand.u32 %s29, 1
          %s180 = smul.addr %s179, 56
          %s181 = scalar_lea.vmem [#allocation2], %s180
          %s182 = smul.u32 14, %s19
          %s183 = ssub.s32 25, %s182
          %p184 = scmp.lt.s32.totalorder %s183, 14
          %s185 = scalar_select %p184, %s183, 14
          %s186 = smul.u32 64, %s185
          %s188 = ssub.s32 896, %s186
          %189 = vsyncadd %s178, %s188
          %p190 = scmp.ne.s32.totalorder 0, %s186
          %s191 = smul.addr %s182, 64
          %s192 = scalar_lea.hbm %s0, %s191
          %s193 = smul.u32 4, %s185
          %s194 = sshll.u32 %s181, 4
          %s195 = int_to_ptr.vmem [resolvable:$true] %s194
          %s196 = sshll.u32 %s193, 4
          %200 = dma.hbm_to_vmem [thread:$0]  (%p190), %s192, %s196, %s195, %s178, 64, 64, 4
        $region28: #{tpu_custom_call.1} parent=23 // pred_fallthru
          _
        // Predicated region
        $region29: #{tpu_custom_call.1} parent=23 // pred_check
          %p201 = pneg %p65
        $region30: #{tpu_custom_call.1} parent=23 // pred_check_branch
          %203 = sbr.rel (%p201) target = $region32
        $region31: #{tpu_custom_call.1} parent=23 // pred_region
          %s204 = sand.u32 %s19, 1
          %s205 = scalar_lea.sflag [#allocation6], %s204
          %s206 = sand.u32 %s55, 1
          %s207 = smul.addr %s206, 56
          %s208 = scalar_lea.vmem [#allocation5], %s207
          %s209 = smul.u32 14, %s19
          %s210 = ssub.s32 25, %s209
          %p211 = scmp.lt.s32.totalorder %s210, 14
          %s212 = scalar_select %p211, %s210, 14
          %s213 = smul.u32 64, %s212
          %s215 = ssub.s32 896, %s213
          %216 = vsyncadd %s205, %s215
          %p217 = scmp.ne.s32.totalorder 0, %s213
          %s218 = smul.addr %s209, 64
          %s219 = scalar_lea.hbm %s1, %s218
          %s220 = smul.u32 4, %s212
          %s221 = sshll.u32 %s208, 4
          %s222 = int_to_ptr.vmem [resolvable:$true] %s221
          %s223 = sshll.u32 %s220, 4
          %227 = dma.hbm_to_vmem [thread:$0]  (%p217), %s219, %s223, %s222, %s205, 64, 64, 4
        $region32: #{tpu_custom_call.1} parent=23 // pred_fallthru
          _
      $region24: #{tpu_custom_call.1} parent=5 // pred_fallthru
        _
      %p228 = scmp.le.s32.totalorder 1, %s19
      %p229 = scmp.lt.s32.totalorder %s19, 3
      %p230 = pnand %p228, %p229
      %p231 = pneg %p230
      // Predicated region
      $region33: #{tpu_custom_call.1} parent=5 // pred_check
        _
      $region34: #{tpu_custom_call.1} parent=5 // pred_check_branch
        %233 = sbr.rel (%p230) target = $region36
      $region35: #{tpu_custom_call.1} parent=5 // pred_region
        %s234 = ssub.s32 %s19, 1
        %s235 = sand.u32 %s32, 1
        %s236 = scalar_lea.sflag [#allocation3], %s235
        %s237 = sand.u32 %s32, 1
        %s238 = smul.addr %s237, 56
        %s239 = scalar_lea.vmem [#allocation2], %s238
        // Predicated region
        $region37: #{tpu_custom_call.1} parent=35 // pred_check
          %p240 = pneg %p45
        $region38: #{tpu_custom_call.1} parent=35 // pred_check_branch
          %242 = sbr.rel (%p240) target = $region40
        $region39: #{tpu_custom_call.1} parent=35 // pred_region
          %243 = dma.done %s236, 896
        $region40: #{tpu_custom_call.1} parent=35 // pred_fallthru
          _
        %s244 = sand.u32 %s24, 1
        %s245 = scalar_lea.sflag [#allocation6], %s244
        %s246 = sand.u32 %s58, 1
        %s247 = smul.addr %s246, 56
        %s248 = scalar_lea.vmem [#allocation5], %s247
        // Predicated region
        $region41: #{tpu_custom_call.1} parent=35 // pred_check
          %p249 = pneg %p71
        $region42: #{tpu_custom_call.1} parent=35 // pred_check_branch
          %251 = sbr.rel (%p249) target = $region44
        $region43: #{tpu_custom_call.1} parent=35 // pred_region
          %252 = dma.done %s245, 896
        $region44: #{tpu_custom_call.1} parent=35 // pred_fallthru
          _
        // Predicated region
        $region45: #{tpu_custom_call.1} parent=35 // pred_check
          %p253 = pneg %p92
        $region46: #{tpu_custom_call.1} parent=35 // pred_check_branch
          %255 = sbr.rel (%p253) target = $region48
        $region47: #{tpu_custom_call.1} parent=35 // pred_region
          %256 = dma.done [#allocation6], 2048
        $region48: #{tpu_custom_call.1} parent=35 // pred_fallthru
          _
        %s257 = sand.u32 %s32, 1
        %s258 = scalar_lea.sflag [#allocation3], %s257
        %s259 = sand.u32 %s32, 1
        %s260 = smul.addr %s259, 56
        %s261 = scalar_lea.vmem [#allocation2], %s260
        %p262 = pneg %p45
        %p263 = pneg %p42
        %s264 = sand.u32 %s24, 1
        %s265 = scalar_lea.sflag [#allocation6], %s264
        %s266 = sand.u32 %s58, 1
        %s267 = smul.addr %s266, 56
        %s268 = scalar_lea.vmem [#allocation5], %s267
        %p269 = pneg %p71
        %p270 = pneg %p68
        %p271 = pneg %p92
        %p272 = pneg %p89
        %p273 = pneg %p113
        %p274 = pneg %p110
        %p275 = pneg %p139
        %p276 = pneg %p136
        %s277 = sand.u32 %s126, 1
        %s278 = scalar_lea.sflag [#allocation4], %s277
        %s279 = sand.u32 %s126, 1
        %s280 = smul.addr %s279, 56
        %s281 = scalar_lea.vmem [#allocation8], %s280
        %s282 = smul.u32 14, %s24
        %s283 = ssub.s32 25, %s282
        %p284 = scmp.lt.s32.totalorder %s283, 14
        %s285 = scalar_select %p284, %s283, 14
        %s286 = smul.u32 64, %s285
        %s287 = smul.u32 14, %s24
        %s288 = ssub.s32 25, %s287
        %p289 = scmp.lt.s32.totalorder %s288, 14
        %s290 = scalar_select %p289, %s288, 14
        %s291 = smul.u32 64, %s290
        %s292 = smul.u32 14, %s24
        %s293 = ssub.s32 25, %s292
        %p294 = scmp.lt.s32.totalorder %s293, 14
        %s295 = scalar_select %p294, %s293, 14
        %s296 = smul.u32 64, %s295
        %v298 = vld [vmem:[%s239] sm:$0xf]
        %v299 = vld [vmem:[%s239 + $0x4] sm:$0xf]
        %v300 = vld [vmem:[%s239 + $0x8] sm:$0xf]
        %v301 = vld [vmem:[%s239 + $0xc] sm:$0xf]
        %v302 = vld [vmem:[%s239 + $0x10] sm:$0xf]
        %v303 = vld [vmem:[%s239 + $0x14] sm:$0xf]
        %v304 = vld [vmem:[%s239 + $0x18] sm:$0xf]
        %v305 = vld [vmem:[%s239 + $0x1c] sm:$0xf]
        %v306 = vld [vmem:[%s239 + $0x20] sm:$0xf]
        %v307 = vld [vmem:[%s239 + $0x24] sm:$0xf]
        %v308 = vld [vmem:[%s239 + $0x28] sm:$0xf]
        %v309 = vld [vmem:[%s239 + $0x2c] sm:$0xf]
        %v310 = vld [vmem:[%s239 + $0x30] sm:$0xf]
        %v311 = vld [vmem:[%s239 + $0x34] sm:$0xf]
        %v312 = vld [vmem:[%s248] sm:$0xf]
        %v313 = vld [vmem:[%s248 + $0x4] sm:$0xf]
        %v314 = vld [vmem:[%s248 + $0x8] sm:$0xf]
        %v315 = vld [vmem:[%s248 + $0xc] sm:$0xf]
        %v316 = vld [vmem:[%s248 + $0x10] sm:$0xf]
        %v317 = vld [vmem:[%s248 + $0x14] sm:$0xf]
        %v318 = vld [vmem:[%s248 + $0x18] sm:$0xf]
        %v319 = vld [vmem:[%s248 + $0x1c] sm:$0xf]
        %v320 = vld [vmem:[%s248 + $0x20] sm:$0xf]
        %v321 = vld [vmem:[%s248 + $0x24] sm:$0xf]
        %v322 = vld [vmem:[%s248 + $0x28] sm:$0xf]
        %v323 = vld [vmem:[%s248 + $0x2c] sm:$0xf]
        %v324 = vld [vmem:[%s248 + $0x30] sm:$0xf]
        %v325 = vld [vmem:[%s248 + $0x34] sm:$0xf]
        %v340 = vunpack.c.l.b16 %v298
        %v341 = vunpack.c.l.b16 %v299
        %v342 = vunpack.c.l.b16 %v300
        %v343 = vunpack.c.l.b16 %v301
        %v344 = vunpack.c.l.b16 %v302
        %v345 = vunpack.c.l.b16 %v303
        %v346 = vunpack.c.l.b16 %v304
        %v347 = vunpack.c.l.b16 %v305
        %v348 = vunpack.c.l.b16 %v306
        %v349 = vunpack.c.l.b16 %v307
        %v350 = vunpack.c.l.b16 %v308
        %v351 = vunpack.c.l.b16 %v309
        %v352 = vunpack.c.l.b16 %v310
        %v353 = vunpack.c.l.b16 %v311
        %v354 = vpack.c.b16 %v341, %v340
        %v355 = vpack.c.b16 %v343, %v342
        %v356 = vpack.c.b16 %v345, %v344
        %v357 = vpack.c.b16 %v347, %v346
        %v358 = vpack.c.b16 %v349, %v348
        %v359 = vpack.c.b16 %v351, %v350
        %v360 = vpack.c.b16 %v353, %v352
        %v382 = vunpack.c.l.b16 %v312
        %v383 = vunpack.c.l.b16 %v313
        %v384 = vunpack.c.l.b16 %v314
        %v385 = vunpack.c.l.b16 %v315
        %v386 = vunpack.c.l.b16 %v316
        %v387 = vunpack.c.l.b16 %v317
        %v388 = vunpack.c.l.b16 %v318
        %v389 = vunpack.c.l.b16 %v319
        %v390 = vunpack.c.l.b16 %v320
        %v391 = vunpack.c.l.b16 %v321
        %v392 = vunpack.c.l.b16 %v322
        %v393 = vunpack.c.l.b16 %v323
        %v394 = vunpack.c.l.b16 %v324
        %v395 = vunpack.c.l.b16 %v325
        %v396 = vpack.c.b16 %v383, %v382
        %v397 = vpack.c.b16 %v385, %v384
        %v398 = vpack.c.b16 %v387, %v386
        %v399 = vpack.c.b16 %v389, %v388
        %v400 = vpack.c.b16 %v391, %v390
        %v401 = vpack.c.b16 %v393, %v392
        %v402 = vpack.c.b16 %v395, %v394
        %v410 = vld [vmem:[#allocation7] sm:$0xf]
        %v411 = vld [vmem:[#allocation7 + $0x4] sm:$0xf]
        %v412 = vld [vmem:[#allocation7 + $0x8] sm:$0xf]
        %v413 = vld [vmem:[#allocation7 + $0xc] sm:$0xf]
        %v414 = vld [vmem:[#allocation7 + $0x10] sm:$0xf]
        %v415 = vld [vmem:[#allocation7 + $0x14] sm:$0xf]
        %v416 = vld [vmem:[#allocation7 + $0x18] sm:$0xf]
        %v417 = vld [vmem:[#allocation7 + $0x1c] sm:$0xf]
        %v418 = vld [vmem:[#allocation7 + $0x20] sm:$0xf]
        %v419 = vld [vmem:[#allocation7 + $0x24] sm:$0xf]
        %v420 = vld [vmem:[#allocation7 + $0x28] sm:$0xf]
        %v421 = vld [vmem:[#allocation7 + $0x2c] sm:$0xf]
        %v422 = vld [vmem:[#allocation7 + $0x30] sm:$0xf]
        %v423 = vld [vmem:[#allocation7 + $0x34] sm:$0xf]
        %v424 = vld [vmem:[#allocation7 + $0x38] sm:$0xf]
        %v425 = vld [vmem:[#allocation7 + $0x3c] sm:$0xf]
        %v426 = vld [vmem:[#allocation7 + $0x40] sm:$0xf]
        %v427 = vld [vmem:[#allocation7 + $0x44] sm:$0xf]
        %v428 = vld [vmem:[#allocation7 + $0x48] sm:$0xf]
        %v429 = vld [vmem:[#allocation7 + $0x4c] sm:$0xf]
        %v430 = vld [vmem:[#allocation7 + $0x50] sm:$0xf]
        %v431 = vld [vmem:[#allocation7 + $0x54] sm:$0xf]
        %v432 = vld [vmem:[#allocation7 + $0x58] sm:$0xf]
        %v433 = vld [vmem:[#allocation7 + $0x5c] sm:$0xf]
        %v434 = vld [vmem:[#allocation7 + $0x60] sm:$0xf]
        %v435 = vld [vmem:[#allocation7 + $0x64] sm:$0xf]
        %v436 = vld [vmem:[#allocation7 + $0x68] sm:$0xf]
        %v437 = vld [vmem:[#allocation7 + $0x6c] sm:$0xf]
        %v438 = vld [vmem:[#allocation7 + $0x70] sm:$0xf]
        %v439 = vld [vmem:[#allocation7 + $0x74] sm:$0xf]
        %v440 = vld [vmem:[#allocation7 + $0x78] sm:$0xf]
        %v441 = vld [vmem:[#allocation7 + $0x7c] sm:$0xf]
        %v442 = vld [vmem:[%s3] sm:$0x1]
        %v444 = vlaneseq
        %v445 = vshrl.u32 %v444, 7
        %v446 = vsub.s32 0, %v445
        %v447 = vrot.slane %v442, %v446
        %v481 = vunpack.c.l.b16 %v410
        %v482 = vunpack.c.l.b16 %v411
        %v483 = vunpack.c.l.b16 %v412
        %v484 = vunpack.c.l.b16 %v413
        %v485 = vunpack.c.l.b16 %v414
        %v486 = vunpack.c.l.b16 %v415
        %v487 = vunpack.c.l.b16 %v416
        %v488 = vunpack.c.l.b16 %v417
        %v489 = vunpack.c.l.b16 %v418
        %v490 = vunpack.c.l.b16 %v419
        %v491 = vunpack.c.l.b16 %v420
        %v492 = vunpack.c.l.b16 %v421
        %v493 = vunpack.c.l.b16 %v422
        %v494 = vunpack.c.l.b16 %v423
        %v495 = vunpack.c.l.b16 %v424
        %v496 = vunpack.c.l.b16 %v425
        %v497 = vunpack.c.l.b16 %v426
        %v498 = vunpack.c.l.b16 %v427
        %v499 = vunpack.c.l.b16 %v428
        %v500 = vunpack.c.l.b16 %v429
        %v501 = vunpack.c.l.b16 %v430
        %v502 = vunpack.c.l.b16 %v431
        %v503 = vunpack.c.l.b16 %v432
        %v504 = vunpack.c.l.b16 %v433
        %v505 = vunpack.c.l.b16 %v434
        %v506 = vunpack.c.l.b16 %v435
        %v507 = vunpack.c.l.b16 %v436
        %v508 = vunpack.c.l.b16 %v437
        %v509 = vunpack.c.l.b16 %v438
        %v510 = vunpack.c.l.b16 %v439
        %v511 = vunpack.c.l.b16 %v440
        %v512 = vunpack.c.l.b16 %v441
        %v513 = vpack.c.b16 %v482, %v481
        %v514 = vpack.c.b16 %v484, %v483
        %v515 = vpack.c.b16 %v486, %v485
        %v516 = vpack.c.b16 %v488, %v487
        %v517 = vpack.c.b16 %v490, %v489
        %v518 = vpack.c.b16 %v492, %v491
        %v519 = vpack.c.b16 %v494, %v493
        %v520 = vpack.c.b16 %v496, %v495
        %v521 = vpack.c.b16 %v498, %v497
        %v522 = vpack.c.b16 %v500, %v499
        %v523 = vpack.c.b16 %v502, %v501
        %v524 = vpack.c.b16 %v504, %v503
        %v525 = vpack.c.b16 %v506, %v505
        %v526 = vpack.c.b16 %v508, %v507
        %v527 = vpack.c.b16 %v510, %v509
        %v528 = vpack.c.b16 %v512, %v511
        %545 = vmatprep.subr.bf16.mxu0 0
        %546 = vmatpush1.bf16.msra.mxu0 %v513
        %547 = vmatprep.subr.bf16.mxu0 0
        %548 = vmatpush1.bf16.msra.mxu0 %v514
        %549 = vmatprep.subr.bf16.mxu0 0
        %550 = vmatpush1.bf16.msra.mxu0 %v515
        %551 = vmatprep.subr.bf16.mxu0 0
        %552 = vmatpush1.bf16.msra.mxu0 %v516
        %553 = vmatprep.subr.bf16.mxu0 0
        %554 = vmatpush1.bf16.msra.mxu0 %v517
        %555 = vmatprep.subr.bf16.mxu0 0
        %556 = vmatpush1.bf16.msra.mxu0 %v518
        %557 = vmatprep.subr.bf16.mxu0 0
        %558 = vmatpush1.bf16.msra.mxu0 %v519
        %559 = vmatprep.subr.bf16.mxu0 0
        %560 = vmatpush1.bf16.msra.mxu0 %v520
        %561 = vmatprep.subr.bf16.mxu0 0
        %562 = vmatpush1.bf16.msra.mxu0 %v521
        %563 = vmatprep.subr.bf16.mxu0 0
        %564 = vmatpush1.bf16.msra.mxu0 %v522
        %565 = vmatprep.subr.bf16.mxu0 0
        %566 = vmatpush1.bf16.msra.mxu0 %v523
        %567 = vmatprep.subr.bf16.mxu0 0
        %568 = vmatpush1.bf16.msra.mxu0 %v524
        %569 = vmatprep.subr.bf16.mxu0 0
        %570 = vmatpush1.bf16.msra.mxu0 %v525
        %571 = vmatprep.subr.bf16.mxu0 0
        %572 = vmatpush1.bf16.msra.mxu0 %v526
        %573 = vmatprep.subr.bf16.mxu0 0
        %574 = vmatpush1.bf16.msra.mxu0 %v527
        %575 = vmatprep.subr.bf16.mxu0 0
        %576 = vmatpush1.bf16.msra.mxu0 %v528
        %577 = vmatprep.mubr.bf16.mxu0 %v396
        %578 = vmatmul.mubr.bf16.gmra.mrb[0].mxu0 %v354
        %v579 = vpop.f32.mrb[0].mxu0
        %v580 = vadd.f32 %v447, %v579
        %v581 = vpop.f32.mrb[0].mxu0
        %v582 = vpop.f32.mrb[0].mxu0
        %v583 = vadd.f32 %v447, %v582
        %v584 = vpop.f32.mrb[0].mxu0
        %585 = vmatprep.mubr.bf16.mxu0 %v397
        %586 = vmatmul.mubr.bf16.gmra.mrb[0].mxu0 %v355
        %v587 = vpop.f32.mrb[0].mxu0
        %v588 = vadd.f32 %v447, %v587
        %v589 = vpop.f32.mrb[0].mxu0
        %v590 = vpop.f32.mrb[0].mxu0
        %v591 = vadd.f32 %v447, %v590
        %v592 = vpop.f32.mrb[0].mxu0
        %593 = vmatprep.mubr.bf16.mxu0 %v398
        %594 = vmatmul.mubr.bf16.gmra.mrb[0].mxu0 %v356
        %v595 = vpop.f32.mrb[0].mxu0
        %v596 = vadd.f32 %v447, %v595
        %v597 = vpop.f32.mrb[0].mxu0
        %v598 = vpop.f32.mrb[0].mxu0
        %v599 = vadd.f32 %v447, %v598
        %v600 = vpop.f32.mrb[0].mxu0
        %601 = vmatprep.mubr.bf16.mxu0 %v399
        %602 = vmatmul.mubr.bf16.gmra.mrb[0].mxu0 %v357
        %v603 = vpop.f32.mrb[0].mxu0
        %v604 = vadd.f32 %v447, %v603
        %v605 = vpop.f32.mrb[0].mxu0
        %v606 = vpop.f32.mrb[0].mxu0
        %v607 = vadd.f32 %v447, %v606
        %v608 = vpop.f32.mrb[0].mxu0
        %609 = vmatprep.mubr.bf16.mxu0 %v400
        %610 = vmatmul.mubr.bf16.gmra.mrb[0].mxu0 %v358
        %v611 = vpop.f32.mrb[0].mxu0
        %v612 = vadd.f32 %v447, %v611
        %v613 = vpop.f32.mrb[0].mxu0
        %v614 = vpop.f32.mrb[0].mxu0
        %v615 = vadd.f32 %v447, %v614
        %v616 = vpop.f32.mrb[0].mxu0
        %617 = vmatprep.mubr.bf16.mxu0 %v401
        %618 = vmatmul.mubr.bf16.gmra.mrb[0].mxu0 %v359
        %v619 = vpop.f32.mrb[0].mxu0
        %v620 = vadd.f32 %v447, %v619
        %v621 = vpop.f32.mrb[0].mxu0
        %v622 = vpop.f32.mrb[0].mxu0
        %v623 = vadd.f32 %v447, %v622
        %v624 = vpop.f32.mrb[0].mxu0
        %625 = vmatprep.mubr.bf16.mxu0 %v402
        %626 = vmatmul.mubr.bf16.gmra.mrb[0].mxu0 %v360
        %v627 = vpop.f32.mrb[0].mxu0
        %v628 = vadd.f32 %v447, %v627
        %v629 = vpop.f32.mrb[0].mxu0
        %v630 = vpop.f32.mrb[0].mxu0
        %v631 = vadd.f32 %v447, %v630
        %v632 = vpop.f32.mrb[0].mxu0
        %633 = vdwg.mxu0
        %v634 = vxor.u32 %v580, 2147483648
        %v635 = vxor.u32 %v583, 2147483648
        %v636 = vxor.u32 %v588, 2147483648
        %v637 = vxor.u32 %v591, 2147483648
        %v638 = vxor.u32 %v596, 2147483648
        %v639 = vxor.u32 %v599, 2147483648
        %v640 = vxor.u32 %v604, 2147483648
        %v641 = vxor.u32 %v607, 2147483648
        %v642 = vxor.u32 %v612, 2147483648
        %v643 = vxor.u32 %v615, 2147483648
        %v644 = vxor.u32 %v620, 2147483648
        %v645 = vxor.u32 %v623, 2147483648
        %v646 = vxor.u32 %v628, 2147483648
        %v647 = vxor.u32 %v631, 2147483648
        %v648 = vmul.f32 %v634, 1.442695
        %v649 = vpow.pop %v648
        %v650 = vmul.f32 %v635, 1.442695
        %v651 = vpow.pop %v650
        %v652 = vmul.f32 %v636, 1.442695
        %v653 = vpow.pop %v652
        %v654 = vmul.f32 %v637, 1.442695
        %v655 = vpow.pop %v654
        %v656 = vmul.f32 %v638, 1.442695
        %v657 = vpow.pop %v656
        %v658 = vmul.f32 %v639, 1.442695
        %v659 = vpow.pop %v658
        %v660 = vmul.f32 %v640, 1.442695
        %v661 = vpow.pop %v660
        %v662 = vmul.f32 %v641, 1.442695
        %v663 = vpow.pop %v662
        %v664 = vmul.f32 %v642, 1.442695
        %v665 = vpow.pop %v664
        %v666 = vmul.f32 %v643, 1.442695
        %v667 = vpow.pop %v666
        %v668 = vmul.f32 %v644, 1.442695
        %v669 = vpow.pop %v668
        %v670 = vmul.f32 %v645, 1.442695
        %v671 = vpow.pop %v670
        %v672 = vmul.f32 %v646, 1.442695
        %v673 = vpow.pop %v672
        %v674 = vmul.f32 %v647, 1.442695
        %v675 = vpow.pop %v674
        %v676 = vadd.f32 %v649, 1.0
        %v677 = vadd.f32 %v651, 1.0
        %v678 = vadd.f32 %v653, 1.0
        %v679 = vadd.f32 %v655, 1.0
        %v680 = vadd.f32 %v657, 1.0
        %v681 = vadd.f32 %v659, 1.0
        %v682 = vadd.f32 %v661, 1.0
        %v683 = vadd.f32 %v663, 1.0
        %v684 = vadd.f32 %v665, 1.0
        %v685 = vadd.f32 %v667, 1.0
        %v686 = vadd.f32 %v669, 1.0
        %v687 = vadd.f32 %v671, 1.0
        %v688 = vadd.f32 %v673, 1.0
        %v689 = vadd.f32 %v675, 1.0
        %v690 = vrcp.pop %v676
        %v691 = vmul.f32 1.0, %v690
        %v692 = vrcp.pop %v677
        %v693 = vmul.f32 1.0, %v692
        %v694 = vrcp.pop %v678
        %v695 = vmul.f32 1.0, %v694
        %v696 = vrcp.pop %v679
        %v697 = vmul.f32 1.0, %v696
        %v698 = vrcp.pop %v680
        %v699 = vmul.f32 1.0, %v698
        %v700 = vrcp.pop %v681
        %v701 = vmul.f32 1.0, %v700
        %v702 = vrcp.pop %v682
        %v703 = vmul.f32 1.0, %v702
        %v704 = vrcp.pop %v683
        %v705 = vmul.f32 1.0, %v704
        %v706 = vrcp.pop %v684
        %v707 = vmul.f32 1.0, %v706
        %v708 = vrcp.pop %v685
        %v709 = vmul.f32 1.0, %v708
        %v710 = vrcp.pop %v686
        %v711 = vmul.f32 1.0, %v710
        %v712 = vrcp.pop %v687
        %v713 = vmul.f32 1.0, %v712
        %v714 = vrcp.pop %v688
        %v715 = vmul.f32 1.0, %v714
        %v716 = vrcp.pop %v689
        %v717 = vmul.f32 1.0, %v716
        %v718 = vpack.c.bf16 %v693, %v691
        %v719 = vpack.c.bf16 %v697, %v695
        %v720 = vpack.c.bf16 %v701, %v699
        %v721 = vpack.c.bf16 %v705, %v703
        %v722 = vpack.c.bf16 %v709, %v707
        %v723 = vpack.c.bf16 %v713, %v711
        %v724 = vpack.c.bf16 %v717, %v715
        %v732 = vunpack.c.l.b16 %v718
        %v733 = vunpack.c.h.b16 %v718
        %v734 = vunpack.c.l.b16 %v719
        %v735 = vunpack.c.h.b16 %v719
        %v736 = vunpack.c.l.b16 %v720
        %v737 = vunpack.c.h.b16 %v720
        %v738 = vunpack.c.l.b16 %v721
        %v739 = vunpack.c.h.b16 %v721
        %v740 = vunpack.c.l.b16 %v722
        %v741 = vunpack.c.h.b16 %v722
        %v742 = vunpack.c.l.b16 %v723
        %v743 = vunpack.c.h.b16 %v723
        %v744 = vunpack.c.l.b16 %v724
        %v745 = vunpack.c.h.b16 %v724
        %v746 = vpack.c.b16 %v732, %v732
        %v747 = vpack.c.b16 %v733, %v733
        %v748 = vpack.c.b16 %v734, %v734
        %v749 = vpack.c.b16 %v735, %v735
        %v750 = vpack.c.b16 %v736, %v736
        %v751 = vpack.c.b16 %v737, %v737
        %v752 = vpack.c.b16 %v738, %v738
        %v753 = vpack.c.b16 %v739, %v739
        %v754 = vpack.c.b16 %v740, %v740
        %v755 = vpack.c.b16 %v741, %v741
        %v756 = vpack.c.b16 %v742, %v742
        %v757 = vpack.c.b16 %v743, %v743
        %v758 = vpack.c.b16 %v744, %v744
        %v759 = vpack.c.b16 %v745, %v745
        %774 = vst [vmem:[%s281] sm:$0xf] %v746
        %775 = vst [vmem:[%s281 + $0x4] sm:$0xf] %v747
        %776 = vst [vmem:[%s281 + $0x8] sm:$0xf] %v748
        %777 = vst [vmem:[%s281 + $0xc] sm:$0xf] %v749
        %778 = vst [vmem:[%s281 + $0x10] sm:$0xf] %v750
        %779 = vst [vmem:[%s281 + $0x14] sm:$0xf] %v751
        %780 = vst [vmem:[%s281 + $0x18] sm:$0xf] %v752
        %781 = vst [vmem:[%s281 + $0x1c] sm:$0xf] %v753
        %782 = vst [vmem:[%s281 + $0x20] sm:$0xf] %v754
        %783 = vst [vmem:[%s281 + $0x24] sm:$0xf] %v755
        %784 = vst [vmem:[%s281 + $0x28] sm:$0xf] %v756
        %785 = vst [vmem:[%s281 + $0x2c] sm:$0xf] %v757
        %786 = vst [vmem:[%s281 + $0x30] sm:$0xf] %v758
        %787 = vst [vmem:[%s281 + $0x34] sm:$0xf] %v759
        %s788 = sand.u32 %s126, 1
        %s789 = scalar_lea.sflag [#allocation4], %s788
        %s790 = sand.u32 %s126, 1
        %s791 = smul.addr %s790, 56
        %s792 = scalar_lea.vmem [#allocation8], %s791
        // Predicated region
        $region49: #{tpu_custom_call.1} parent=35 // pred_check
          %p793 = pneg %p136
        $region50: #{tpu_custom_call.1} parent=35 // pred_check_branch
          %795 = sbr.rel (%p793) target = $region52
        $region51: #{tpu_custom_call.1} parent=35 // pred_region
          %s796 = smul.u32 14, %s24
          %s797 = ssub.s32 25, %s796
          %p798 = scmp.lt.s32.totalorder %s797, 14
          %s799 = scalar_select %p798, %s797, 14
          %s800 = smul.u32 64, %s799
          %s802 = ssub.s32 896, %s800
          %803 = vsyncadd %s789, %s802
          %p804 = scmp.ne.s32.totalorder 0, %s800
          %s805 = smul.addr %s796, 64
          %s806 = scalar_lea.hbm %s4, %s805
          %s807 = smul.u32 4, %s799
          %s808 = sshll.u32 %s792, 4
          %s809 = int_to_ptr.vmem [resolvable:$true] %s808
          %s810 = sshll.u32 %s807, 4
          %814 = dma.vmem_to_hbm [thread:$0]  (%p804), %s809, %s810, %s806, %s789, 64, 64, 4
        $region52: #{tpu_custom_call.1} parent=35 // pred_fallthru
          _
      $region36: #{tpu_custom_call.1} parent=5 // pred_fallthru
        _
      %p815 = scmp.le.s32.totalorder 2, %s19
      // Predicated region
      $region53: #{tpu_custom_call.1} parent=5 // pred_check
        %p816 = pneg %p815
      $region54: #{tpu_custom_call.1} parent=5 // pred_check_branch
        %818 = sbr.rel (%p816) target = $region56
      $region55: #{tpu_custom_call.1} parent=5 // pred_region
        %s819 = ssub.s32 %s19, 2
        // Predicated region
        $region57: #{tpu_custom_call.1} parent=55 // pred_check
          %p820 = pneg %p142
        $region58: #{tpu_custom_call.1} parent=55 // pred_check_branch
          %822 = sbr.rel (%p820) target = $region60
        $region59: #{tpu_custom_call.1} parent=55 // pred_region
          %s823 = sand.u32 %s127, 1
          %s824 = scalar_lea.sflag [#allocation4], %s823
          %s825 = sand.u32 %s127, 1
          %s826 = smul.addr %s825, 56
          %s827 = scalar_lea.vmem [#allocation8], %s826
          %828 = dma.done %s824, 896
        $region60: #{tpu_custom_call.1} parent=55 // pred_fallthru
          _
      $region56: #{tpu_custom_call.1} parent=5 // pred_fallthru
        _
    $region6: #{tpu_custom_call.1} parent=1 // loop_footer
      %s23 = sadd.s32 1, %s19
    $region7: #{tpu_custom_call.1} parent=1 // loop_footer_branch
      %18 = sbr.rel target = $region3
    $region8: #{tpu_custom_call.1} parent=1 // loop_exit
      _
    %829 = vsyncpa [#allocation3], 1
    %s830 = scalar_lea.sflag [#allocation3], 1
    %831 = vsyncpa %s830, 1
    %832 = vsyncpa [#allocation6], 1
    %s833 = scalar_lea.sflag [#allocation6], 1
    %834 = vsyncpa %s833, 1
    %835 = vsyncpa [#allocation4], 1
    %s836 = scalar_lea.sflag [#allocation4], 1
    %837 = vsyncpa %s836, 1

</llo_original>
